<compile_context>
chip_gen: v6e
topology: v6e:2x2x1
jax: 0.10.0
libtpu: 0.0.40
codegen_flags: <defaults>
</compile_context>

<pallas_src>
import math

import jax
import jax.numpy as jnp
from jax import lax
from jax.experimental import pallas as pl
from jax.experimental.pallas import tpu as pltpu


def _round_up(x, m):
    return ((x + m - 1) // m) * m


def _make_kernel(use_binary, training):
    """Builds the kernel body for a (use_binary, training) configuration."""

    def kernel(*refs):
        idx = 0
        if use_binary and training:
            rand_ref = refs[idx]
            idx += 1
        (y_ref, h_ref, desc_ref,
         wfused_ref, bh_ref, wout_ref, bout_ref) = refs[idx:idx + 7]
        idx += 7
        feats_ref = refs[idx]
        idx += 1
        probs_ref = refs[idx] if use_binary else None

        # bf16 operands for the MXU; all accumulation in f32.
        y = y_ref[...].astype(jnp.bfloat16)            # [TB, C]
        desc = desc_ref[...].astype(jnp.bfloat16)      # [TB, C, H]
        h_c = h_ref[...].astype(jnp.bfloat16)          # [TB, H]

        # desc_w[b, h] = sum_c y[b, c] * desc[b, c, h]
        # Batched MXU contraction: [TB, 1, C] x [TB, C, H] -> [TB, 1, H]
        dw3 = lax.dot_general(
            y[:, None, :], desc,
            dimension_numbers=(((2,), (1,)), ((0,), (0,))),
            preferred_element_type=jnp.float32)
        desc_w = jnp.squeeze(dw3, axis=1)              # [TB, H] f32

        # h_w = tanh([h_c, desc_w] @ W_fused + b_h), W_fused = [W_h^T ; W_d^T]
        x = jnp.concatenate([h_c, desc_w.astype(jnp.bfloat16)], axis=-1)  # [TB, 2H]
        pre = jnp.dot(x, wfused_ref[...],
                      preferred_element_type=jnp.float32) + bh_ref[...]
        h_w = jnp.tanh(pre)                            # [TB, H] f32

        scores = jnp.dot(h_w.astype(jnp.bfloat16), wout_ref[...],
                         preferred_element_type=jnp.float32) + bout_ref[...]  # [TB, Mp]

        if use_binary:
            probs = jax.nn.sigmoid(scores)
            probs_ref[...] = probs
            if training:
                # Bernoulli sample: uniform < p (uniforms streamed from HBM,
                # mirroring the host np.random.rand of the PyTorch module).
                feats_ref[...] = (rand_ref[...] < probs).astype(jnp.float32)
            else:
                # round(sigmoid(s)) == (s > 0); the s == 0 tie resolves to 0,
                # matching torch.round's round-half-to-even of 0.5.
                feats_ref[...] = (scores > 0.0).astype(jnp.float32)
        else:
            feats_ref[...] = scores

    return kernel


def prepare_params(params):
    """One-time weight preprocessing (hoisted out of the per-call path):
    transpose to [in, out], fuse w_h/w_d into one [2H, H] matrix, cast MXU
    operands to bf16, and pad the message dim to a multiple of 128 lanes so
    the kernel's output stores are lane-dense."""
    H = params["w_h_weight"].shape[0]
    M = params["w_bias"].shape[0]
    Mp = _round_up(M, 128)
    w_fused = jnp.concatenate(
        [jnp.transpose(params["w_h_weight"]),     # consumes h_c
         jnp.transpose(params["w_d_weight"])],    # consumes desc_w
        axis=0).astype(jnp.bfloat16)              # [2H, H]
    b_h = params["w_h_bias"].astype(jnp.float32).reshape(1, H)
    w_out = jnp.pad(jnp.transpose(params["w_weight"]),
                    ((0, 0), (0, Mp - M))).astype(jnp.bfloat16)      # [H, Mp]
    b_out = jnp.pad(params["w_bias"], (0, Mp - M)).astype(jnp.float32).reshape(1, Mp)
    return {"w_fused": w_fused, "b_h": b_h, "w_out": w_out, "b_out": b_out,
            "hid_dim": H, "m_dim": M, "m_pad": Mp}


def message_generator_forward(prep, y_scores, h_c, desc, *, use_binary=True,
                              training=False, rng_key=None, block_b=256,
                              vmem_budget_bytes=16 * 1024 * 1024):
    """Forward pass. `prep` comes from prepare_params(params)."""
    B, C = y_scores.shape
    H, M, Mp = prep["hid_dim"], prep["m_dim"], prep["m_pad"]
    assert h_c.shape == (B, H) and desc.shape == (B, C, H)

    # Batch tile: multiple of 8 sublanes, capped by block_b and by a VMEM
    # budget so the double-buffered desc tile stays well under the default
    # scoped VMEM on every generation (v7x has the smallest physical VMEM).
    desc_row_bytes = 2 * C * H * 4                     # double-buffered f32 rows
    tb_cap = max(8, (vmem_budget_bytes // max(desc_row_bytes, 1)) // 8 * 8)
    TB = min(_round_up(B, 8), block_b, tb_cap)
    TB = max(8, (TB // 8) * 8)
    Bp = _round_up(B, TB)
    grid = (Bp // TB,)

    if Bp != B:  # pad batch to a whole number of tiles; padded rows sliced off
        y_scores = jnp.pad(y_scores, ((0, Bp - B), (0, 0)))
        h_c = jnp.pad(h_c, ((0, Bp - B), (0, 0)))
        desc = jnp.pad(desc, ((0, Bp - B), (0, 0), (0, 0)))

    kernel = _make_kernel(use_binary, training)

    inputs, in_specs = [], []
    if use_binary and training:
        if rng_key is None:
            rng_key = jax.random.PRNGKey(0)
        rand = jax.random.uniform(rng_key, (Bp, Mp), dtype=jnp.float32)
        inputs.append(rand)
        in_specs.append(pl.BlockSpec((TB, Mp), lambda i: (i, 0)))
    inputs += [y_scores, h_c, desc,
               prep["w_fused"], prep["b_h"], prep["w_out"], prep["b_out"]]
    in_specs += [
        pl.BlockSpec((TB, C), lambda i: (i, 0)),
        pl.BlockSpec((TB, H), lambda i: (i, 0)),
        pl.BlockSpec((TB, C, H), lambda i: (i, 0, 0)),
        # Weights: constant index_maps -> VMEM-resident across batch tiles.
        pl.BlockSpec((2 * H, H), lambda i: (0, 0)),
        pl.BlockSpec((1, H), lambda i: (0, 0)),
        pl.BlockSpec((H, Mp), lambda i: (0, 0)),
        pl.BlockSpec((1, Mp), lambda i: (0, 0)),
    ]

    out_block = pl.BlockSpec((TB, Mp), lambda i: (i, 0))
    if use_binary:
        out_shape = (jax.ShapeDtypeStruct((Bp, Mp), jnp.float32),
                     jax.ShapeDtypeStruct((Bp, Mp), jnp.float32))
        out_specs = (out_block, out_block)
    else:
        out_shape = jax.ShapeDtypeStruct((Bp, Mp), jnp.float32)
        out_specs = out_block

    result = pl.pallas_call(
        kernel,
        grid=grid,
        in_specs=in_specs,
        out_specs=out_specs,
        out_shape=out_shape,
        compiler_params=pltpu.CompilerParams(
            dimension_semantics=("parallel",)),
    )(*inputs)

    if use_binary:
        w_feats, w_probs = result
        return w_feats[:B, :M], w_probs[:B, :M]
    return result[:B, :M], None


def _xavier_normal(key, shape):
    fan_out, fan_in = shape
    std = math.sqrt(2.0 / (fan_in + fan_out))
    return jax.random.normal(key, shape, dtype=jnp.float32) * std


def init_params(key, m_dim, hid_dim):
    k1, k2, k3 = jax.random.split(key, 3)
    return {
        "w_h_weight": _xavier_normal(k1, (hid_dim, hid_dim)),
        "w_h_bias": jnp.zeros((hid_dim,), jnp.float32),
        "w_d_weight": _xavier_normal(k2, (hid_dim, hid_dim)),
        "w_weight": _xavier_normal(k3, (m_dim, hid_dim)),
        "w_bias": jnp.zeros((m_dim,), jnp.float32),
    }


def _reference(params, y_scores, h_c, desc):
    desc_w = jnp.sum(y_scores[:, :, None] * desc, axis=1)
    h_w = jnp.tanh(h_c @ params["w_h_weight"].T + params["w_h_bias"]
                   + desc_w @ params["w_d_weight"].T)
    scores = h_w @ params["w_weight"].T + params["w_bias"]
    probs = jax.nn.sigmoid(scores)
    return jnp.round(probs), probs, scores


if __name__ == "__main__":
    B, C, H, M = 2, 4, 32, 8   # batch, num_classes, hid_dim, m_dim

    key = jax.random.PRNGKey(0)
    kp, ky, kh, kd, kr = jax.random.split(key, 5)

    params = init_params(kp, M, H)
    prep = prepare_params(params)   # one-time weight prep (hoisted out of fwd)

    y_scores = jax.nn.softmax(jax.random.normal(ky, (B, C), jnp.float32), axis=-1)
    h_c = jax.random.normal(kh, (B, H), jnp.float32)
    desc = jax.random.normal(kd, (B, C, H), jnp.float32)

    ref_feats, ref_probs, ref_scores = _reference(params, y_scores, h_c, desc)

    # Eval mode (use_binary=True, training=False): deterministic round(sigmoid).
    w_feats, w_probs = message_generator_forward(
        prep, y_scores, h_c, desc, use_binary=True, training=False)
    jax.block_until_ready((w_feats, w_probs))
    assert w_feats.shape == (B, M) and w_probs.shape == (B, M)
    assert jnp.allclose(w_probs, ref_probs, atol=5e-2), "probs mismatch"
    # Compare rounded features away from the 0.5 boundary (bf16 matmuls can
    # only flip rounding within the small numerical-error band around it).
    safe = jnp.abs(ref_probs - 0.5) > 5e-2
    assert bool(jnp.all(jnp.where(safe, w_feats == ref_feats, True))), "feats mismatch"
    assert bool(jnp.all((w_feats == 0.0) | (w_feats == 1.0)))

    # Training mode: Bernoulli sampling (uniform < sigmoid), uniforms from
    # jax.random (matches the host np.random.rand semantics of the original).
    w_feats_tr, w_probs_tr = message_generator_forward(
        prep, y_scores, h_c, desc, use_binary=True, training=True, rng_key=kr)
    jax.block_until_ready((w_feats_tr, w_probs_tr))
    assert bool(jnp.all((w_feats_tr == 0.0) | (w_feats_tr == 1.0))), "binary check"
    assert jnp.allclose(w_probs_tr, ref_probs, atol=5e-2)

    # use_binary=False path: raw scores, no sigmoid, single output.
    w_scores_nb, none_probs = message_generator_forward(
        prep, y_scores, h_c, desc, use_binary=False, training=False)
    jax.block_until_ready(w_scores_nb)
    assert none_probs is None
    assert jnp.allclose(w_scores_nb, ref_scores, atol=1e-1), "scores mismatch"

    print("KERNEL_OK")
</pallas_src>

<mosaic_0001>
module attributes {stable_mosaic.version = 11 : i64} {
  func.func @kernel(%arg0: i32, %arg1: memref<8x4xf32, #tpu.memory_space<vmem>>, %arg2: memref<8x32xf32, #tpu.memory_space<vmem>>, %arg3: memref<8x4x32xf32, #tpu.memory_space<vmem>>, %arg4: memref<64x32xbf16, #tpu.memory_space<vmem>>, %arg5: memref<1x32xf32, #tpu.memory_space<vmem>>, %arg6: memref<32x128xbf16, #tpu.memory_space<vmem>>, %arg7: memref<1x128xf32, #tpu.memory_space<vmem>>, %arg8: memref<8x128xf32, #tpu.memory_space<vmem>>, %arg9: memref<8x128xf32, #tpu.memory_space<vmem>>) attributes {dimension_semantics = [#tpu.dimension_semantics<parallel>], iteration_bounds = array<i64: 1>, scalar_prefetch = 0 : i64, scratch_operands = 0 : i64, tpu.core_type = #tpu.core_type<tc>, window_params = [{transform_indices = @transform_0, window_bounds = array<i64: 8, 4>}, {transform_indices = @transform_1, window_bounds = array<i64: 8, 32>}, {transform_indices = @transform_2, window_bounds = array<i64: 8, 4, 32>}, {pipeline_mode = #tpu.pipeline_mode<synchronous>, transform_indices = @transform_3, window_bounds = array<i64: 64, 32>}, {pipeline_mode = #tpu.pipeline_mode<synchronous>, transform_indices = @transform_4, window_bounds = array<i64: 1, 32>}, {pipeline_mode = #tpu.pipeline_mode<synchronous>, transform_indices = @transform_5, window_bounds = array<i64: 32, 128>}, {pipeline_mode = #tpu.pipeline_mode<synchronous>, transform_indices = @transform_6, window_bounds = array<i64: 1, 128>}, {transform_indices = @transform_7, window_bounds = array<i64: 8, 128>}, {transform_indices = @transform_8, window_bounds = array<i64: 8, 128>}]} {
    %c0 = arith.constant 0 : index
    %c0_0 = arith.constant 0 : index
    %0 = vector.load %arg1[%c0, %c0_0] : memref<8x4xf32, #tpu.memory_space<vmem>>, vector<8x4xf32>
    %1 = arith.truncf %0 : vector<8x4xf32> to vector<8x4xbf16>
    %c0_1 = arith.constant 0 : index
    %c0_2 = arith.constant 0 : index
    %c0_3 = arith.constant 0 : index
    %2 = vector.load %arg3[%c0_1, %c0_2, %c0_3] : memref<8x4x32xf32, #tpu.memory_space<vmem>>, vector<8x4x32xf32>
    %3 = arith.truncf %2 : vector<8x4x32xf32> to vector<8x4x32xbf16>
    %c0_4 = arith.constant 0 : index
    %c0_5 = arith.constant 0 : index
    %4 = vector.load %arg2[%c0_4, %c0_5] : memref<8x32xf32, #tpu.memory_space<vmem>>, vector<8x32xf32>
    %5 = arith.truncf %4 : vector<8x32xf32> to vector<8x32xbf16>
    %6 = vector.shape_cast %1 : vector<8x4xbf16> to vector<8x1x4xbf16>
    %cst = arith.constant dense<0.000000e+00> : vector<8x1x32xf32>
    %7 = tpu.matmul %6, %3, %cst {dimension_numbers = #tpu.dot_dimension_numbers<[2], [1], [1], [2], [0, 0, 0, 1, 1, 2], [0], [0]>} : vector<8x1x4xbf16>, vector<8x4x32xbf16>, vector<8x1x32xf32> -> vector<8x1x32xf32>
    %8 = vector.shape_cast %7 : vector<8x1x32xf32> to vector<8x32xf32>
    %9 = arith.truncf %8 : vector<8x32xf32> to vector<8x32xbf16>
    %10 = tpu.concatenate %5, %9 in 1 : vector<8x32xbf16>, vector<8x32xbf16> -> vector<8x64xbf16>
    %c0_6 = arith.constant 0 : index
    %c0_7 = arith.constant 0 : index
    %11 = vector.load %arg4[%c0_6, %c0_7] : memref<64x32xbf16, #tpu.memory_space<vmem>>, vector<64x32xbf16>
    %cst_8 = arith.constant dense<0.000000e+00> : vector<8x32xf32>
    %12 = tpu.matmul %10, %11, %cst_8 {dimension_numbers = #tpu.dot_dimension_numbers<[1], [0], [0], [1], [0, 0, 1, 1], [], []>} : vector<8x64xbf16>, vector<64x32xbf16>, vector<8x32xf32> -> vector<8x32xf32>
    %c0_9 = arith.constant 0 : index
    %c0_10 = arith.constant 0 : index
    %13 = vector.load %arg5[%c0_9, %c0_10] : memref<1x32xf32, #tpu.memory_space<vmem>>, vector<1x32xf32>
    %14 = vector.broadcast %13 : vector<1x32xf32> to vector<8x32xf32>
    %15 = arith.addf %12, %14 : vector<8x32xf32>
    %16 = math.tanh %15 : vector<8x32xf32>
    %17 = arith.truncf %16 : vector<8x32xf32> to vector<8x32xbf16>
    %c0_11 = arith.constant 0 : index
    %c0_12 = arith.constant 0 : index
    %18 = vector.load %arg6[%c0_11, %c0_12] : memref<32x128xbf16, #tpu.memory_space<vmem>>, vector<32x128xbf16>
    %cst_13 = arith.constant dense<0.000000e+00> : vector<8x128xf32>
    %19 = tpu.matmul %17, %18, %cst_13 {dimension_numbers = #tpu.dot_dimension_numbers<[1], [0], [0], [1], [0, 0, 1, 1], [], []>} : vector<8x32xbf16>, vector<32x128xbf16>, vector<8x128xf32> -> vector<8x128xf32>
    %c0_14 = arith.constant 0 : index
    %c0_15 = arith.constant 0 : index
    %20 = vector.load %arg7[%c0_14, %c0_15] : memref<1x128xf32, #tpu.memory_space<vmem>>, vector<1x128xf32>
    %21 = vector.broadcast %20 : vector<1x128xf32> to vector<8x128xf32>
    %22 = arith.addf %19, %21 : vector<8x128xf32>
    %23 = arith.negf %22 : vector<8x128xf32>
    %24 = math.exp %23 : vector<8x128xf32>
    %cst_16 = arith.constant 1.000000e+00 : f32
    %25 = vector.broadcast %cst_16 : f32 to vector<8x128xf32>
    %26 = arith.addf %25, %24 : vector<8x128xf32>
    %27 = arith.divf %25, %26 : vector<8x128xf32>
    %c0_17 = arith.constant 0 : index
    %c0_18 = arith.constant 0 : index
    %28 = vector.load %arg9[%c0_17, %c0_18] : memref<8x128xf32, #tpu.memory_space<vmem>>, vector<8x128xf32>
    tpu.vector_store %arg9[%c0_17, %c0_18], %27 {strides = array<i32>} : memref<8x128xf32, #tpu.memory_space<vmem>>, vector<8x128xf32>,
    %cst_19 = arith.constant 0.000000e+00 : f32
    %29 = vector.broadcast %cst_19 : f32 to vector<8x128xf32>
    %30 = arith.cmpf ogt, %22, %29 : vector<8x128xf32>
    %31 = arith.extui %30 : vector<8x128xi1> to vector<8x128xi32>
    %32 = arith.sitofp %31 : vector<8x128xi32> to vector<8x128xf32>
    %c0_20 = arith.constant 0 : index
    %c0_21 = arith.constant 0 : index
    %33 = vector.load %arg8[%c0_20, %c0_21] : memref<8x128xf32, #tpu.memory_space<vmem>>, vector<8x128xf32>
    tpu.vector_store %arg8[%c0_20, %c0_21], %32 {strides = array<i32>} : memref<8x128xf32, #tpu.memory_space<vmem>>, vector<8x128xf32>,
    return
  }
  func.func @transform_0(%arg0: i32) -> (i32, i32) {
    %c0_i32 = arith.constant 0 : i32
    %c0_i32_0 = arith.constant 0 : i32
    return %arg0, %c0_i32 : i32, i32
  }
  func.func @transform_1(%arg0: i32) -> (i32, i32) {
    %c0_i32 = arith.constant 0 : i32
    %c0_i32_0 = arith.constant 0 : i32
    return %arg0, %c0_i32 : i32, i32
  }
  func.func @transform_2(%arg0: i32) -> (i32, i32, i32) {
    %c0_i32 = arith.constant 0 : i32
    %c0_i32_0 = arith.constant 0 : i32
    %c0_i32_1 = arith.constant 0 : i32
    return %arg0, %c0_i32, %c0_i32_0 : i32, i32, i32
  }
  func.func @transform_3(%arg0: i32) -> (i32, i32) {
    %c0_i32 = arith.constant 0 : i32
    %c0_i32_0 = arith.constant 0 : i32
    %c0_i32_1 = arith.constant 0 : i32
    return %c0_i32, %c0_i32_0 : i32, i32
  }
  func.func @transform_4(%arg0: i32) -> (i32, i32) {
    %c0_i32 = arith.constant 0 : i32
    %c0_i32_0 = arith.constant 0 : i32
    %c0_i32_1 = arith.constant 0 : i32
    return %c0_i32, %c0_i32_0 : i32, i32
  }
  func.func @transform_5(%arg0: i32) -> (i32, i32) {
    %c0_i32 = arith.constant 0 : i32
    %c0_i32_0 = arith.constant 0 : i32
    %c0_i32_1 = arith.constant 0 : i32
    return %c0_i32, %c0_i32_0 : i32, i32
  }
  func.func @transform_6(%arg0: i32) -> (i32, i32) {
    %c0_i32 = arith.constant 0 : i32
    %c0_i32_0 = arith.constant 0 : i32
    %c0_i32_1 = arith.constant 0 : i32
    return %c0_i32, %c0_i32_0 : i32, i32
  }
  func.func @transform_7(%arg0: i32) -> (i32, i32) {
    %c0_i32 = arith.constant 0 : i32
    %c0_i32_0 = arith.constant 0 : i32
    return %arg0, %c0_i32 : i32, i32
  }
  func.func @transform_8(%arg0: i32) -> (i32, i32) {
    %c0_i32 = arith.constant 0 : i32
    %c0_i32_0 = arith.constant 0 : i32
    return %arg0, %c0_i32 : i32, i32
  }
}

</mosaic_0001>

<llo_original>
// kernel: tpu_custom_call.1
$region0: #{tpu_custom_call.1}
  #allocation0 [shape = 'u32[]', space=smem, size = 0x4, offset = 0x4, fixed_abs, tag = 'smem constant byte address 0x4 - core index']
  #allocation1 [shape = 'u32[144,128]{1,0:T(1,128)}', space=vmem, size = 0x12000, scoped, tag = 'internal scratch']
  %s0 = inlined_call_operand.vmem [shape: f32[8,4], index: 0, kind: input, shape index: {}]
  %s1 = inlined_call_operand.hbm [shape: f32[8,32], index: 1, kind: input, shape index: {}]
  %s2 = inlined_call_operand.vmem [shape: f32[8,4,32], index: 2, kind: input, shape index: {}]
  %s3 = inlined_call_operand.vmem [shape: bf16[64,32], index: 3, kind: input, shape index: {}]
  %s4 = inlined_call_operand.vmem [shape: f32[1,32], index: 4, kind: input, shape index: {}]
  %s5 = inlined_call_operand.vmem [shape: bf16[32,128], index: 5, kind: input, shape index: {}]
  %s6 = inlined_call_operand.vmem [shape: f32[1,128], index: 6, kind: input, shape index: {}]
  %s7 = inlined_call_operand.hbm [shape: f32[8,128], index: 7, kind: output, shape index: {0}]
  %s8 = inlined_call_operand.hbm [shape: f32[8,128], index: 8, kind: output, shape index: {1}]
  %9 = xla_tuple %s7, %s8
  %s10 = sld [smem:[#allocation0]]
  $region50: #{tpu_custom_call.1} parent=0
    _
  %s12 = ssub.s32 1, %s10
  %s13 = scalar_select 0, %s12, %s10
  $region1: #{tpu_custom_call.1} parent=0
    #allocation2 [shape = 'u8[4096]{0}', space=vmem, size = 0x1000, scoped, tag = 'input window, operand 1, single buffered']
    #allocation3 [shape = 's32[1]{0}', space=sflag, size = 0x4, scoped, tag = 'scoped memory for tpu_custom_call.1']
    #allocation4 [shape = 's32[1]{0}', space=sflag, size = 0x4, scoped, tag = 'scoped memory for tpu_custom_call.1']
    #allocation5 [shape = 'u8[4096]{0}', space=vmem, size = 0x1000, scoped, tag = 'output window, operand 0, single buffered']
    #allocation6 [shape = 'u8[4096]{0}', space=vmem, size = 0x1000, scoped, tag = 'output window, operand 1, single buffered']
    #allocation7 [shape = 's32[1]{0}', space=sflag, size = 0x4, scoped, tag = 'scoped memory for tpu_custom_call.1']
    %14 = vsyncpa [#allocation3], 0
    %15 = vsyncpa [#allocation4], 0
    %16 = vsyncpa [#allocation7], 0
    // Predicated region
    $region2: #{tpu_custom_call.1} parent=1 // pred_check
      _
    $region3: #{tpu_custom_call.1} parent=1 // pred_check_branch
      %18 = sbr.rel (0) target = $region5
    $region4: #{tpu_custom_call.1} parent=1 // pred_region
      _
    $region5: #{tpu_custom_call.1} parent=1 // pred_fallthru
      _
    // Predicated region
    $region6: #{tpu_custom_call.1} parent=1 // pred_check
      _
    $region7: #{tpu_custom_call.1} parent=1 // pred_check_branch
      %20 = sbr.rel (0) target = $region9
    $region8: #{tpu_custom_call.1} parent=1 // pred_region
      %s22 = ssub.s32 128, 128
      %23 = vsyncadd [#allocation3], %s22
      %s25 = sshll.u32 [#allocation2], 4
      %s26 = int_to_ptr.vmem [resolvable:$true] %s25
      %28 = dma.hbm_to_vmem [thread:$0]  %s1, 128, %s26, [#allocation3]
    $region9: #{tpu_custom_call.1} parent=1 // pred_fallthru
      _
    // Predicated region
    $region10: #{tpu_custom_call.1} parent=1 // pred_check
      _
    $region11: #{tpu_custom_call.1} parent=1 // pred_check_branch
      %30 = sbr.rel (0) target = $region13
    $region12: #{tpu_custom_call.1} parent=1 // pred_region
      _
    $region13: #{tpu_custom_call.1} parent=1 // pred_fallthru
      _
    // Predicated region
    $region14: #{tpu_custom_call.1} parent=1 // pred_check
      _
    $region15: #{tpu_custom_call.1} parent=1 // pred_check_branch
      %32 = sbr.rel (0) target = $region17
    $region16: #{tpu_custom_call.1} parent=1 // pred_region
      _
    $region17: #{tpu_custom_call.1} parent=1 // pred_fallthru
      _
    // Predicated region
    $region18: #{tpu_custom_call.1} parent=1 // pred_check
      _
    $region19: #{tpu_custom_call.1} parent=1 // pred_check_branch
      %34 = sbr.rel (0) target = $region21
    $region20: #{tpu_custom_call.1} parent=1 // pred_region
      _
    $region21: #{tpu_custom_call.1} parent=1 // pred_fallthru
      _
    // Predicated region
    $region22: #{tpu_custom_call.1} parent=1 // pred_check
      _
    $region23: #{tpu_custom_call.1} parent=1 // pred_check_branch
      %36 = sbr.rel (0) target = $region25
    $region24: #{tpu_custom_call.1} parent=1 // pred_region
      _
    $region25: #{tpu_custom_call.1} parent=1 // pred_fallthru
      _
    // Predicated region
    $region26: #{tpu_custom_call.1} parent=1 // pred_check
      _
    $region27: #{tpu_custom_call.1} parent=1 // pred_check_branch
      %38 = sbr.rel (0) target = $region29
    $region28: #{tpu_custom_call.1} parent=1 // pred_region
      _
    $region29: #{tpu_custom_call.1} parent=1 // pred_fallthru
      _
    // Predicated region
    $region30: #{tpu_custom_call.1} parent=1 // pred_check
      _
    $region31: #{tpu_custom_call.1} parent=1 // pred_check_branch
      %40 = sbr.rel (0) target = $region33
    $region32: #{tpu_custom_call.1} parent=1 // pred_region
      %41 = dma.done [#allocation3], 128
    $region33: #{tpu_custom_call.1} parent=1 // pred_fallthru
      _
    %v43 = vld [vmem:[%s0] sm:$0xff]
    %v44 = vpack.c.bf16 %v43, %v43
    %v45 = vld [vmem:[%s2] sm:$0xf]
    %v46 = vld [vmem:[%s2 + $0x4] sm:$0xf]
    %v47 = vld [vmem:[%s2 + $0x8] sm:$0xf]
    %v48 = vld [vmem:[%s2 + $0xc] sm:$0xf]
    %v49 = vld [vmem:[%s2 + $0x10] sm:$0xf]
    %v50 = vld [vmem:[%s2 + $0x14] sm:$0xf]
    %v51 = vld [vmem:[%s2 + $0x18] sm:$0xf]
    %v52 = vld [vmem:[%s2 + $0x1c] sm:$0xf]
    %v53 = vpack.c.bf16 %v45, %v45
    %v54 = vpack.c.bf16 %v46, %v46
    %v55 = vpack.c.bf16 %v47, %v47
    %v56 = vpack.c.bf16 %v48, %v48
    %v57 = vpack.c.bf16 %v49, %v49
    %v58 = vpack.c.bf16 %v50, %v50
    %v59 = vpack.c.bf16 %v51, %v51
    %v60 = vpack.c.bf16 %v52, %v52
    %v61 = vld [vmem:[#allocation2] sm:$0xff]
    %v62 = vpack.c.bf16 %v61, %v61
    %v65 = vunpack.c.l.s4 1966171168
    %v66 = vunpack.c.0.s8 %v65
    %v67 = vlaneseq
    %v68 = vshrl.u32 %v67, 7
    %v69 = vsub.s32 %v66, %v68
    %v70 = vrot.slane %v44, %v69
    %v71 = vcombine.high %v70, %v70
    %v73 = vunpack.c.l.s4 1966171168
    %v74 = vunpack.c.0.s8 %v73
    %v75 = vlaneseq
    %v76 = vshrl.u32 %v75, 7
    %v77 = vsub.s32 %v74, %v76
    %v78 = vrot.slane %v70, %v77
    %v80 = vunpack.c.l.s4 1966171168
    %v81 = vunpack.c.0.s8 %v80
    %v82 = vlaneseq
    %v83 = vshrl.u32 %v82, 7
    %v84 = vsub.s32 %v81, %v83
    %v85 = vrot.slane %v71, %v84
    %v86 = vcombine.high %v78, %v78
    %v87 = vcombine.high %v85, %v85
    %v88 = vunpack.i.l.s16 %v78
    %v89 = vunpack.i.h.s16 %v78
    %v90 = vunpack.i.l.s16 %v85
    %v91 = vunpack.i.h.s16 %v85
    %v92 = vunpack.i.l.s16 %v86
    %v93 = vunpack.i.h.s16 %v86
    %v94 = vunpack.i.l.s16 %v87
    %v95 = vunpack.i.h.s16 %v87
    %v96 = vpack.i.b16 %v88, %v88
    %v97 = vlaneseq
    %v98 = vshrl.u32 %v97, 7
    %v99 = vsub.s32 0, %v98
    %v100 = vrot.slane %v96, %v99
    %vm101 = vcmask 31744
    %v103 = vsel %vm101, %v100, 0
    %vm105 = vcmask 1041408
    %v107 = vsel %vm105, %v53, 0
    %109 = vmatprep.subr.bf16.mxu0 0
    %110 = vmatpush1.bf16.msra.mxu0 0
    %111 = vmatprep.subr.bf16.mxu0 0
    %112 = vmatpush1.bf16.msra.mxu0 0
    %113 = vmatprep.subr.bf16.mxu0 0
    %114 = vmatpush1.bf16.msra.mxu0 0
    %115 = vmatprep.subr.bf16.mxu0 0
    %116 = vmatpush1.bf16.msra.mxu0 0
    %117 = vmatprep.subr.bf16.mxu0 0
    %118 = vmatpush1.bf16.msra.mxu0 0
    %119 = vmatprep.subr.bf16.mxu0 0
    %120 = vmatpush1.bf16.msra.mxu0 0
    %121 = vmatprep.subr.bf16.mxu0 0
    %122 = vmatpush1.bf16.msra.mxu0 0
    %123 = vmatprep.subr.bf16.mxu0 0
    %124 = vmatpush1.bf16.msra.mxu0 %v107
    %125 = vmatprep.subr.bf16.mxu0 0
    %126 = vmatpush2.bf16.msra.mxu0 0
    %127 = vmatprep.subr.bf16.mxu0 0
    %128 = vmatpush2.bf16.msra.mxu0 0
    %129 = vmatprep.subr.bf16.mxu0 0
    %130 = vmatpush2.bf16.msra.mxu0 0
    %131 = vmatprep.subr.bf16.mxu0 0
    %132 = vmatpush2.bf16.msra.mxu0 0
    %133 = vmatprep.subr.bf16.mxu0 0
    %134 = vmatpush2.bf16.msra.mxu0 0
    %135 = vmatprep.subr.bf16.mxu0 0
    %136 = vmatpush2.bf16.msra.mxu0 0
    %137 = vmatprep.subr.bf16.mxu0 0
    %138 = vmatpush2.bf16.msra.mxu0 0
    %139 = vmatprep.subr.bf16.mxu0 0
    %140 = vmatpush2.bf16.msra.mxu0 0
    %141 = vmatprep.mubr.bf16.mxu0 0
    %142 = vmatmul.mubr.bf16.gmra.mxu0 %v103
    %v143 = vpop.f32.mrf.mxu0
    %v144 = vadd.f32 0.0, %v143
    %v145 = vpop.f32.mrf.mxu0
    %v146 = vpop.f32.mrf.mxu0
    %v147 = vpop.f32.mrf.mxu0
    %148 = vdwg.mxu0
    %v149 = vpack.i.b16 %v89, %v89
    %v150 = vlaneseq
    %v151 = vshrl.u32 %v150, 7
    %v152 = vsub.s32 0, %v151
    %v153 = vrot.slane %v149, %v152
    %v155 = vsel %vm101, %v153, 0
    %v158 = vsel %vm105, %v54, 0
    %160 = vmatprep.subr.bf16.mxu0 0
    %161 = vmatpush1.bf16.msra.mxu0 0
    %162 = vmatprep.subr.bf16.mxu0 0
    %163 = vmatpush1.bf16.msra.mxu0 0
    %164 = vmatprep.subr.bf16.mxu0 0
    %165 = vmatpush1.bf16.msra.mxu0 0
    %166 = vmatprep.subr.bf16.mxu0 0
    %167 = vmatpush1.bf16.msra.mxu0 0
    %168 = vmatprep.subr.bf16.mxu0 0
    %169 = vmatpush1.bf16.msra.mxu0 0
    %170 = vmatprep.subr.bf16.mxu0 0
    %171 = vmatpush1.bf16.msra.mxu0 0
    %172 = vmatprep.subr.bf16.mxu0 0
    %173 = vmatpush1.bf16.msra.mxu0 0
    %174 = vmatprep.subr.bf16.mxu0 0
    %175 = vmatpush1.bf16.msra.mxu0 %v158
    %176 = vmatprep.subr.bf16.mxu0 0
    %177 = vmatpush2.bf16.msra.mxu0 0
    %178 = vmatprep.subr.bf16.mxu0 0
    %179 = vmatpush2.bf16.msra.mxu0 0
    %180 = vmatprep.subr.bf16.mxu0 0
    %181 = vmatpush2.bf16.msra.mxu0 0
    %182 = vmatprep.subr.bf16.mxu0 0
    %183 = vmatpush2.bf16.msra.mxu0 0
    %184 = vmatprep.subr.bf16.mxu0 0
    %185 = vmatpush2.bf16.msra.mxu0 0
    %186 = vmatprep.subr.bf16.mxu0 0
    %187 = vmatpush2.bf16.msra.mxu0 0
    %188 = vmatprep.subr.bf16.mxu0 0
    %189 = vmatpush2.bf16.msra.mxu0 0
    %190 = vmatprep.subr.bf16.mxu0 0
    %191 = vmatpush2.bf16.msra.mxu0 0
    %192 = vmatprep.mubr.bf16.mxu0 0
    %193 = vmatmul.mubr.bf16.gmra.mxu0 %v155
    %v194 = vpop.f32.mrf.mxu0
    %v195 = vadd.f32 0.0, %v194
    %v196 = vpop.f32.mrf.mxu0
    %v197 = vpop.f32.mrf.mxu0
    %v198 = vpop.f32.mrf.mxu0
    %199 = vdwg.mxu0
    %v200 = vpack.i.b16 %v90, %v90
    %v201 = vlaneseq
    %v202 = vshrl.u32 %v201, 7
    %v203 = vsub.s32 0, %v202
    %v204 = vrot.slane %v200, %v203
    %v206 = vsel %vm101, %v204, 0
    %v209 = vsel %vm105, %v55, 0
    %211 = vmatprep.subr.bf16.mxu0 0
    %212 = vmatpush1.bf16.msra.mxu0 0
    %213 = vmatprep.subr.bf16.mxu0 0
    %214 = vmatpush1.bf16.msra.mxu0 0
    %215 = vmatprep.subr.bf16.mxu0 0
    %216 = vmatpush1.bf16.msra.mxu0 0
    %217 = vmatprep.subr.bf16.mxu0 0
    %218 = vmatpush1.bf16.msra.mxu0 0
    %219 = vmatprep.subr.bf16.mxu0 0
    %220 = vmatpush1.bf16.msra.mxu0 0
    %221 = vmatprep.subr.bf16.mxu0 0
    %222 = vmatpush1.bf16.msra.mxu0 0
    %223 = vmatprep.subr.bf16.mxu0 0
    %224 = vmatpush1.bf16.msra.mxu0 0
    %225 = vmatprep.subr.bf16.mxu0 0
    %226 = vmatpush1.bf16.msra.mxu0 %v209
    %227 = vmatprep.subr.bf16.mxu0 0
    %228 = vmatpush2.bf16.msra.mxu0 0
    %229 = vmatprep.subr.bf16.mxu0 0
    %230 = vmatpush2.bf16.msra.mxu0 0
    %231 = vmatprep.subr.bf16.mxu0 0
    %232 = vmatpush2.bf16.msra.mxu0 0
    %233 = vmatprep.subr.bf16.mxu0 0
    %234 = vmatpush2.bf16.msra.mxu0 0
    %235 = vmatprep.subr.bf16.mxu0 0
    %236 = vmatpush2.bf16.msra.mxu0 0
    %237 = vmatprep.subr.bf16.mxu0 0
    %238 = vmatpush2.bf16.msra.mxu0 0
    %239 = vmatprep.subr.bf16.mxu0 0
    %240 = vmatpush2.bf16.msra.mxu0 0
    %241 = vmatprep.subr.bf16.mxu0 0
    %242 = vmatpush2.bf16.msra.mxu0 0
    %243 = vmatprep.mubr.bf16.mxu0 0
    %244 = vmatmul.mubr.bf16.gmra.mxu0 %v206
    %v245 = vpop.f32.mrf.mxu0
    %v246 = vadd.f32 0.0, %v245
    %v247 = vpop.f32.mrf.mxu0
    %v248 = vpop.f32.mrf.mxu0
    %v249 = vpop.f32.mrf.mxu0
    %250 = vdwg.mxu0
    %v251 = vpack.i.b16 %v91, %v91
    %v252 = vlaneseq
    %v253 = vshrl.u32 %v252, 7
    %v254 = vsub.s32 0, %v253
    %v255 = vrot.slane %v251, %v254
    %v257 = vsel %vm101, %v255, 0
    %v260 = vsel %vm105, %v56, 0
    %262 = vmatprep.subr.bf16.mxu0 0
    %263 = vmatpush1.bf16.msra.mxu0 0
    %264 = vmatprep.subr.bf16.mxu0 0
    %265 = vmatpush1.bf16.msra.mxu0 0
    %266 = vmatprep.subr.bf16.mxu0 0
    %267 = vmatpush1.bf16.msra.mxu0 0
    %268 = vmatprep.subr.bf16.mxu0 0
    %269 = vmatpush1.bf16.msra.mxu0 0
    %270 = vmatprep.subr.bf16.mxu0 0
    %271 = vmatpush1.bf16.msra.mxu0 0
    %272 = vmatprep.subr.bf16.mxu0 0
    %273 = vmatpush1.bf16.msra.mxu0 0
    %274 = vmatprep.subr.bf16.mxu0 0
    %275 = vmatpush1.bf16.msra.mxu0 0
    %276 = vmatprep.subr.bf16.mxu0 0
    %277 = vmatpush1.bf16.msra.mxu0 %v260
    %278 = vmatprep.subr.bf16.mxu0 0
    %279 = vmatpush2.bf16.msra.mxu0 0
    %280 = vmatprep.subr.bf16.mxu0 0
    %281 = vmatpush2.bf16.msra.mxu0 0
    %282 = vmatprep.subr.bf16.mxu0 0
    %283 = vmatpush2.bf16.msra.mxu0 0
    %284 = vmatprep.subr.bf16.mxu0 0
    %285 = vmatpush2.bf16.msra.mxu0 0
    %286 = vmatprep.subr.bf16.mxu0 0
    %287 = vmatpush2.bf16.msra.mxu0 0
    %288 = vmatprep.subr.bf16.mxu0 0
    %289 = vmatpush2.bf16.msra.mxu0 0
    %290 = vmatprep.subr.bf16.mxu0 0
    %291 = vmatpush2.bf16.msra.mxu0 0
    %292 = vmatprep.subr.bf16.mxu0 0
    %293 = vmatpush2.bf16.msra.mxu0 0
    %294 = vmatprep.mubr.bf16.mxu0 0
    %295 = vmatmul.mubr.bf16.gmra.mxu0 %v257
    %v296 = vpop.f32.mrf.mxu0
    %v297 = vadd.f32 0.0, %v296
    %v298 = vpop.f32.mrf.mxu0
    %v299 = vpop.f32.mrf.mxu0
    %v300 = vpop.f32.mrf.mxu0
    %301 = vdwg.mxu0
    %v302 = vpack.i.b16 %v92, %v92
    %v303 = vlaneseq
    %v304 = vshrl.u32 %v303, 7
    %v305 = vsub.s32 0, %v304
    %v306 = vrot.slane %v302, %v305
    %v308 = vsel %vm101, %v306, 0
    %v311 = vsel %vm105, %v57, 0
    %313 = vmatprep.subr.bf16.mxu0 0
    %314 = vmatpush1.bf16.msra.mxu0 0
    %315 = vmatprep.subr.bf16.mxu0 0
    %316 = vmatpush1.bf16.msra.mxu0 0
    %317 = vmatprep.subr.bf16.mxu0 0
    %318 = vmatpush1.bf16.msra.mxu0 0
    %319 = vmatprep.subr.bf16.mxu0 0
    %320 = vmatpush1.bf16.msra.mxu0 0
    %321 = vmatprep.subr.bf16.mxu0 0
    %322 = vmatpush1.bf16.msra.mxu0 0
    %323 = vmatprep.subr.bf16.mxu0 0
    %324 = vmatpush1.bf16.msra.mxu0 0
    %325 = vmatprep.subr.bf16.mxu0 0
    %326 = vmatpush1.bf16.msra.mxu0 0
    %327 = vmatprep.subr.bf16.mxu0 0
    %328 = vmatpush1.bf16.msra.mxu0 %v311
    %329 = vmatprep.subr.bf16.mxu0 0
    %330 = vmatpush2.bf16.msra.mxu0 0
    %331 = vmatprep.subr.bf16.mxu0 0
    %332 = vmatpush2.bf16.msra.mxu0 0
    %333 = vmatprep.subr.bf16.mxu0 0
    %334 = vmatpush2.bf16.msra.mxu0 0
    %335 = vmatprep.subr.bf16.mxu0 0
    %336 = vmatpush2.bf16.msra.mxu0 0
    %337 = vmatprep.subr.bf16.mxu0 0
    %338 = vmatpush2.bf16.msra.mxu0 0
    %339 = vmatprep.subr.bf16.mxu0 0
    %340 = vmatpush2.bf16.msra.mxu0 0
    %341 = vmatprep.subr.bf16.mxu0 0
    %342 = vmatpush2.bf16.msra.mxu0 0
    %343 = vmatprep.subr.bf16.mxu0 0
    %344 = vmatpush2.bf16.msra.mxu0 0
    %345 = vmatprep.mubr.bf16.mxu0 0
    %346 = vmatmul.mubr.bf16.gmra.mxu0 %v308
    %v347 = vpop.f32.mrf.mxu0
    %v348 = vadd.f32 0.0, %v347
    %v349 = vpop.f32.mrf.mxu0
    %v350 = vpop.f32.mrf.mxu0
    %v351 = vpop.f32.mrf.mxu0
    %352 = vdwg.mxu0
    %v353 = vpack.i.b16 %v93, %v93
    %v354 = vlaneseq
    %v355 = vshrl.u32 %v354, 7
    %v356 = vsub.s32 0, %v355
    %v357 = vrot.slane %v353, %v356
    %v359 = vsel %vm101, %v357, 0
    %v362 = vsel %vm105, %v58, 0
    %364 = vmatprep.subr.bf16.mxu0 0
    %365 = vmatpush1.bf16.msra.mxu0 0
    %366 = vmatprep.subr.bf16.mxu0 0
    %367 = vmatpush1.bf16.msra.mxu0 0
    %368 = vmatprep.subr.bf16.mxu0 0
    %369 = vmatpush1.bf16.msra.mxu0 0
    %370 = vmatprep.subr.bf16.mxu0 0
    %371 = vmatpush1.bf16.msra.mxu0 0
    %372 = vmatprep.subr.bf16.mxu0 0
    %373 = vmatpush1.bf16.msra.mxu0 0
    %374 = vmatprep.subr.bf16.mxu0 0
    %375 = vmatpush1.bf16.msra.mxu0 0
    %376 = vmatprep.subr.bf16.mxu0 0
    %377 = vmatpush1.bf16.msra.mxu0 0
    %378 = vmatprep.subr.bf16.mxu0 0
    %379 = vmatpush1.bf16.msra.mxu0 %v362
    %380 = vmatprep.subr.bf16.mxu0 0
    %381 = vmatpush2.bf16.msra.mxu0 0
    %382 = vmatprep.subr.bf16.mxu0 0
    %383 = vmatpush2.bf16.msra.mxu0 0
    %384 = vmatprep.subr.bf16.mxu0 0
    %385 = vmatpush2.bf16.msra.mxu0 0
    %386 = vmatprep.subr.bf16.mxu0 0
    %387 = vmatpush2.bf16.msra.mxu0 0
    %388 = vmatprep.subr.bf16.mxu0 0
    %389 = vmatpush2.bf16.msra.mxu0 0
    %390 = vmatprep.subr.bf16.mxu0 0
    %391 = vmatpush2.bf16.msra.mxu0 0
    %392 = vmatprep.subr.bf16.mxu0 0
    %393 = vmatpush2.bf16.msra.mxu0 0
    %394 = vmatprep.subr.bf16.mxu0 0
    %395 = vmatpush2.bf16.msra.mxu0 0
    %396 = vmatprep.mubr.bf16.mxu0 0
    %397 = vmatmul.mubr.bf16.gmra.mxu0 %v359
    %v398 = vpop.f32.mrf.mxu0
    %v399 = vadd.f32 0.0, %v398
    %v400 = vpop.f32.mrf.mxu0
    %v401 = vpop.f32.mrf.mxu0
    %v402 = vpop.f32.mrf.mxu0
    %403 = vdwg.mxu0
    %v404 = vpack.i.b16 %v94, %v94
    %v405 = vlaneseq
    %v406 = vshrl.u32 %v405, 7
    %v407 = vsub.s32 0, %v406
    %v408 = vrot.slane %v404, %v407
    %v410 = vsel %vm101, %v408, 0
    %v413 = vsel %vm105, %v59, 0
    %415 = vmatprep.subr.bf16.mxu0 0
    %416 = vmatpush1.bf16.msra.mxu0 0
    %417 = vmatprep.subr.bf16.mxu0 0
    %418 = vmatpush1.bf16.msra.mxu0 0
    %419 = vmatprep.subr.bf16.mxu0 0
    %420 = vmatpush1.bf16.msra.mxu0 0
    %421 = vmatprep.subr.bf16.mxu0 0
    %422 = vmatpush1.bf16.msra.mxu0 0
    %423 = vmatprep.subr.bf16.mxu0 0
    %424 = vmatpush1.bf16.msra.mxu0 0
    %425 = vmatprep.subr.bf16.mxu0 0
    %426 = vmatpush1.bf16.msra.mxu0 0
    %427 = vmatprep.subr.bf16.mxu0 0
    %428 = vmatpush1.bf16.msra.mxu0 0
    %429 = vmatprep.subr.bf16.mxu0 0
    %430 = vmatpush1.bf16.msra.mxu0 %v413
    %431 = vmatprep.subr.bf16.mxu0 0
    %432 = vmatpush2.bf16.msra.mxu0 0
    %433 = vmatprep.subr.bf16.mxu0 0
    %434 = vmatpush2.bf16.msra.mxu0 0
    %435 = vmatprep.subr.bf16.mxu0 0
    %436 = vmatpush2.bf16.msra.mxu0 0
    %437 = vmatprep.subr.bf16.mxu0 0
    %438 = vmatpush2.bf16.msra.mxu0 0
    %439 = vmatprep.subr.bf16.mxu0 0
    %440 = vmatpush2.bf16.msra.mxu0 0
    %441 = vmatprep.subr.bf16.mxu0 0
    %442 = vmatpush2.bf16.msra.mxu0 0
    %443 = vmatprep.subr.bf16.mxu0 0
    %444 = vmatpush2.bf16.msra.mxu0 0
    %445 = vmatprep.subr.bf16.mxu0 0
    %446 = vmatpush2.bf16.msra.mxu0 0
    %447 = vmatprep.mubr.bf16.mxu0 0
    %448 = vmatmul.mubr.bf16.gmra.mxu0 %v410
    %v449 = vpop.f32.mrf.mxu0
    %v450 = vadd.f32 0.0, %v449
    %v451 = vpop.f32.mrf.mxu0
    %v452 = vpop.f32.mrf.mxu0
    %v453 = vpop.f32.mrf.mxu0
    %454 = vdwg.mxu0
    %v455 = vpack.i.b16 %v95, %v95
    %v456 = vlaneseq
    %v457 = vshrl.u32 %v456, 7
    %v458 = vsub.s32 0, %v457
    %v459 = vrot.slane %v455, %v458
    %v461 = vsel %vm101, %v459, 0
    %v464 = vsel %vm105, %v60, 0
    %466 = vmatprep.subr.bf16.mxu0 0
    %467 = vmatpush1.bf16.msra.mxu0 0
    %468 = vmatprep.subr.bf16.mxu0 0
    %469 = vmatpush1.bf16.msra.mxu0 0
    %470 = vmatprep.subr.bf16.mxu0 0
    %471 = vmatpush1.bf16.msra.mxu0 0
    %472 = vmatprep.subr.bf16.mxu0 0
    %473 = vmatpush1.bf16.msra.mxu0 0
    %474 = vmatprep.subr.bf16.mxu0 0
    %475 = vmatpush1.bf16.msra.mxu0 0
    %476 = vmatprep.subr.bf16.mxu0 0
    %477 = vmatpush1.bf16.msra.mxu0 0
    %478 = vmatprep.subr.bf16.mxu0 0
    %479 = vmatpush1.bf16.msra.mxu0 0
    %480 = vmatprep.subr.bf16.mxu0 0
    %481 = vmatpush1.bf16.msra.mxu0 %v464
    %482 = vmatprep.subr.bf16.mxu0 0
    %483 = vmatpush2.bf16.msra.mxu0 0
    %484 = vmatprep.subr.bf16.mxu0 0
    %485 = vmatpush2.bf16.msra.mxu0 0
    %486 = vmatprep.subr.bf16.mxu0 0
    %487 = vmatpush2.bf16.msra.mxu0 0
    %488 = vmatprep.subr.bf16.mxu0 0
    %489 = vmatpush2.bf16.msra.mxu0 0
    %490 = vmatprep.subr.bf16.mxu0 0
    %491 = vmatpush2.bf16.msra.mxu0 0
    %492 = vmatprep.subr.bf16.mxu0 0
    %493 = vmatpush2.bf16.msra.mxu0 0
    %494 = vmatprep.subr.bf16.mxu0 0
    %495 = vmatpush2.bf16.msra.mxu0 0
    %496 = vmatprep.subr.bf16.mxu0 0
    %497 = vmatpush2.bf16.msra.mxu0 0
    %498 = vmatprep.mubr.bf16.mxu0 0
    %499 = vmatmul.mubr.bf16.gmra.mxu0 %v461
    %v500 = vpop.f32.mrf.mxu0
    %v501 = vadd.f32 0.0, %v500
    %v502 = vpop.f32.mrf.mxu0
    %v503 = vpop.f32.mrf.mxu0
    %v504 = vpop.f32.mrf.mxu0
    %505 = vdwg.mxu0
    %v506 = vpack.c.bf16 %v144, %v144
    %v507 = vpack.c.bf16 %v195, %v195
    %v508 = vpack.c.bf16 %v246, %v246
    %v509 = vpack.c.bf16 %v297, %v297
    %v510 = vpack.c.bf16 %v348, %v348
    %v511 = vpack.c.bf16 %v399, %v399
    %v512 = vpack.c.bf16 %v450, %v450
    %v513 = vpack.c.bf16 %v501, %v501
    %v522 = vunpack.c.l.b16 %v506
    %v523 = vunpack.c.l.b16 %v507
    %v524 = vunpack.c.l.b16 %v508
    %v525 = vunpack.c.l.b16 %v509
    %v526 = vunpack.c.l.b16 %v510
    %v527 = vunpack.c.l.b16 %v511
    %v528 = vunpack.c.l.b16 %v512
    %v529 = vunpack.c.l.b16 %v513
    %v530 = vrot.slane %v523, 7
    %vm531 = vcmask 1041409
    %v532 = vsel %vm531, %v530, %v522
    %v533 = vrot.slane %v524, 6
    %vm534 = vcmask 1042434
    %v535 = vsel %vm534, %v533, %v532
    %v536 = vrot.slane %v525, 5
    %vm537 = vcmask 1043459
    %v538 = vsel %vm537, %v536, %v535
    %v539 = vrot.slane %v526, 4
    %vm540 = vcmask 1044484
    %v541 = vsel %vm540, %v539, %v538
    %v542 = vrot.slane %v527, 3
    %vm543 = vcmask 1045509
    %v544 = vsel %vm543, %v542, %v541
    %v545 = vrot.slane %v528, 2
    %vm546 = vcmask 1046534
    %v547 = vsel %vm546, %v545, %v544
    %v548 = vrot.slane %v529, 1
    %vm549 = vcmask 1047559
    %v550 = vsel %vm549, %v548, %v547
    %v551 = vpack.c.b16 %v550, %v550
    %552 = vrot.lane.b32.xlu0 %v551, 32
    %v553 = vpop.permute.xlu0 %552
    %vm554 = vcmask 261120
    %v557 = vsel %vm554, %v62, %v553
    %v558 = vld [vmem:[%s3] sm:$0xf]
    %v559 = vld [vmem:[%s3 + $0x4] sm:$0xf]
    %v560 = vld [vmem:[%s3 + $0x8] sm:$0xf]
    %v561 = vld [vmem:[%s3 + $0xc] sm:$0xf]
    %v562 = vld [vmem:[%s3 + $0x10] sm:$0xf]
    %v563 = vld [vmem:[%s3 + $0x14] sm:$0xf]
    %v564 = vld [vmem:[%s3 + $0x18] sm:$0xf]
    %v565 = vld [vmem:[%s3 + $0x1c] sm:$0xf]
    %v566 = vld [vmem:[%s4] sm:$0x1]
    %v568 = vlaneseq
    %v569 = vshrl.u32 %v568, 7
    %v570 = vsub.s32 0, %v569
    %v571 = vrot.slane %v566, %v570
    %v581 = vunpack.c.l.b16 %v558
    %v582 = vunpack.c.l.b16 %v559
    %v583 = vunpack.c.l.b16 %v560
    %v584 = vunpack.c.l.b16 %v561
    %v585 = vunpack.c.l.b16 %v562
    %v586 = vunpack.c.l.b16 %v563
    %v587 = vunpack.c.l.b16 %v564
    %v588 = vunpack.c.l.b16 %v565
    %v589 = vpack.c.b16 %v582, %v581
    %v590 = vpack.c.b16 %v584, %v583
    %v591 = vpack.c.b16 %v586, %v585
    %v592 = vpack.c.b16 %v588, %v587
    %vm597 = vcmask 523264
    %v598 = vsel %vm597, %v557, 0
    %600 = vmatprep.subr.bf16.mxu0 0
    %601 = vmatpush1.bf16.msra.mxu0 0
    %602 = vmatprep.subr.bf16.mxu0 0
    %603 = vmatpush1.bf16.msra.mxu0 0
    %604 = vmatprep.subr.bf16.mxu0 0
    %605 = vmatpush1.bf16.msra.mxu0 0
    %606 = vmatprep.subr.bf16.mxu0 0
    %607 = vmatpush1.bf16.msra.mxu0 0
    %608 = vmatprep.subr.bf16.mxu0 0
    %609 = vmatpush1.bf16.msra.mxu0 %v592
    %610 = vmatprep.subr.bf16.mxu0 0
    %611 = vmatpush1.bf16.msra.mxu0 %v591
    %612 = vmatprep.subr.bf16.mxu0 0
    %613 = vmatpush1.bf16.msra.mxu0 %v590
    %614 = vmatprep.subr.bf16.mxu0 0
    %615 = vmatpush1.bf16.msra.mxu0 %v589
    %616 = vmatprep.subr.bf16.mxu0 0
    %617 = vmatpush2.bf16.msra.mxu0 0
    %618 = vmatprep.subr.bf16.mxu0 0
    %619 = vmatpush2.bf16.msra.mxu0 0
    %620 = vmatprep.subr.bf16.mxu0 0
    %621 = vmatpush2.bf16.msra.mxu0 0
    %622 = vmatprep.subr.bf16.mxu0 0
    %623 = vmatpush2.bf16.msra.mxu0 0
    %624 = vmatprep.subr.bf16.mxu0 0
    %625 = vmatpush2.bf16.msra.mxu0 0
    %626 = vmatprep.subr.bf16.mxu0 0
    %627 = vmatpush2.bf16.msra.mxu0 0
    %628 = vmatprep.subr.bf16.mxu0 0
    %629 = vmatpush2.bf16.msra.mxu0 0
    %630 = vmatprep.subr.bf16.mxu0 0
    %631 = vmatpush2.bf16.msra.mxu0 0
    %632 = vmatprep.mubr.bf16.mxu0 0
    %633 = vmatmul.mubr.bf16.gmra.mxu0 %v598
    %v634 = vpop.f32.mrf.mxu0
    %v635 = vadd.f32 %v571, %v634
    %v636 = vpop.f32.mrf.mxu0
    %v637 = vpop.f32.mrf.mxu0
    %v638 = vpop.f32.mrf.mxu0
    %639 = vdwg.mxu0
    %v640 = vtanh.pop %v635
    %v641 = vpack.c.bf16 %v640, %v640
    %v642 = vld [vmem:[%s5] sm:$0xf]
    %v643 = vld [vmem:[%s5 + $0x4] sm:$0xf]
    %v644 = vld [vmem:[%s5 + $0x8] sm:$0xf]
    %v645 = vld [vmem:[%s5 + $0xc] sm:$0xf]
    %v646 = vld [vmem:[%s6] sm:$0x1]
    %v648 = vlaneseq
    %v649 = vshrl.u32 %v648, 7
    %v650 = vsub.s32 0, %v649
    %v651 = vrot.slane %v646, %v650
    %v657 = vunpack.c.l.b16 %v642
    %v658 = vunpack.c.l.b16 %v643
    %v659 = vunpack.c.l.b16 %v644
    %v660 = vunpack.c.l.b16 %v645
    %v661 = vpack.c.b16 %v658, %v657
    %v662 = vpack.c.b16 %v660, %v659
    %v666 = vsel %vm554, %v641, 0
    %668 = vmatprep.subr.bf16.mxu0 0
    %669 = vmatpush1.bf16.msra.mxu0 0
    %670 = vmatprep.subr.bf16.mxu0 0
    %671 = vmatpush1.bf16.msra.mxu0 0
    %672 = vmatprep.subr.bf16.mxu0 0
    %673 = vmatpush1.bf16.msra.mxu0 0
    %674 = vmatprep.subr.bf16.mxu0 0
    %675 = vmatpush1.bf16.msra.mxu0 0
    %676 = vmatprep.subr.bf16.mxu0 0
    %677 = vmatpush1.bf16.msra.mxu0 0
    %678 = vmatprep.subr.bf16.mxu0 0
    %679 = vmatpush1.bf16.msra.mxu0 0
    %680 = vmatprep.subr.bf16.mxu0 0
    %681 = vmatpush1.bf16.msra.mxu0 %v662
    %682 = vmatprep.subr.bf16.mxu0 0
    %683 = vmatpush1.bf16.msra.mxu0 %v661
    %684 = vmatprep.subr.bf16.mxu0 0
    %685 = vmatpush2.bf16.msra.mxu0 0
    %686 = vmatprep.subr.bf16.mxu0 0
    %687 = vmatpush2.bf16.msra.mxu0 0
    %688 = vmatprep.subr.bf16.mxu0 0
    %689 = vmatpush2.bf16.msra.mxu0 0
    %690 = vmatprep.subr.bf16.mxu0 0
    %691 = vmatpush2.bf16.msra.mxu0 0
    %692 = vmatprep.subr.bf16.mxu0 0
    %693 = vmatpush2.bf16.msra.mxu0 0
    %694 = vmatprep.subr.bf16.mxu0 0
    %695 = vmatpush2.bf16.msra.mxu0 0
    %696 = vmatprep.subr.bf16.mxu0 0
    %697 = vmatpush2.bf16.msra.mxu0 0
    %698 = vmatprep.subr.bf16.mxu0 0
    %699 = vmatpush2.bf16.msra.mxu0 0
    %700 = vmatprep.mubr.bf16.mxu0 0
    %701 = vmatmul.mubr.bf16.gmra.mxu0 %v666
    %v702 = vpop.f32.mrf.mxu0
    %v703 = vadd.f32 %v651, %v702
    %v704 = vpop.f32.mrf.mxu0
    %v705 = vpop.f32.mrf.mxu0
    %v706 = vpop.f32.mrf.mxu0
    %707 = vdwg.mxu0
    %v708 = vxor.u32 %v703, 2147483648
    %v709 = vmul.f32 %v708, 1.442695
    %v710 = vpow.pop %v709
    %v711 = vadd.f32 %v710, 1.0
    %v712 = vrcp.pop %v711
    %v713 = vmul.f32 1.0, %v712
    %714 = vst [vmem:[#allocation6] sm:$0xff] %v713
    %vm715 = vcmp.gt.f32.partialorder %v703, 0.0
    %v716 = vsel %vm715, 1, 0
    %v717 = vcvt.s32.f32 %v716
    %718 = vst [vmem:[#allocation5] sm:$0xff] %v717
    // Predicated region
    $region34: #{tpu_custom_call.1} parent=1 // pred_check
      _
    $region35: #{tpu_custom_call.1} parent=1 // pred_check_branch
      %720 = sbr.rel (0) target = $region37
    $region36: #{tpu_custom_call.1} parent=1 // pred_region
      %s722 = ssub.s32 128, 128
      %723 = vsyncadd [#allocation4], %s722
      %s725 = sshll.u32 [#allocation5], 4
      %s726 = int_to_ptr.vmem [resolvable:$true] %s725
      %728 = dma.vmem_to_hbm [thread:$0]  %s726, 128, %s7, [#allocation4]
    $region37: #{tpu_custom_call.1} parent=1 // pred_fallthru
      _
    // Predicated region
    $region38: #{tpu_custom_call.1} parent=1 // pred_check
      _
    $region39: #{tpu_custom_call.1} parent=1 // pred_check_branch
      %730 = sbr.rel (0) target = $region41
    $region40: #{tpu_custom_call.1} parent=1 // pred_region
      %s732 = ssub.s32 128, 128
      %733 = vsyncadd [#allocation7], %s732
      %s735 = sshll.u32 [#allocation6], 4
      %s736 = int_to_ptr.vmem [resolvable:$true] %s735
      %738 = dma.vmem_to_hbm [thread:$0]  %s736, 128, %s8, [#allocation7]
    $region41: #{tpu_custom_call.1} parent=1 // pred_fallthru
      _
    // Predicated region
    $region42: #{tpu_custom_call.1} parent=1 // pred_check
      _
    $region43: #{tpu_custom_call.1} parent=1 // pred_check_branch
      %740 = sbr.rel (0) target = $region45
    $region44: #{tpu_custom_call.1} parent=1 // pred_region
      %741 = dma.done [#allocation4], 128
    $region45: #{tpu_custom_call.1} parent=1 // pred_fallthru
      _
    // Predicated region
    $region46: #{tpu_custom_call.1} parent=1 // pred_check
      _
    $region47: #{tpu_custom_call.1} parent=1 // pred_check_branch
      %743 = sbr.rel (0) target = $region49
    $region48: #{tpu_custom_call.1} parent=1 // pred_region
      %744 = dma.done [#allocation7], 128
    $region49: #{tpu_custom_call.1} parent=1 // pred_fallthru
      _
    %745 = vsyncpa [#allocation3], 1
    %746 = vsyncpa [#allocation4], 1
    %747 = vsyncpa [#allocation7], 1

</llo_original>
